<compile_context>
chip_gen: v6e
topology: v6e:2x2x1
jax: 0.10.0
libtpu: 0.0.40
codegen_flags: <defaults>
</compile_context>

<pallas_src>
import functools

import jax
import jax.numpy as jnp
from jax.experimental import pallas as pl
from jax.experimental.pallas import tpu as pltpu

# --- module config (BatchNorm2d_q(bits=8, num_features=C)) -------------------
BITS = 8
STEP = 2.0 ** (-5)
INV_STEP = 2.0 ** 5            # exact reciprocal of STEP (power of two)
QMIN = -(2.0 ** (BITS - 1))
QMAX = 2.0 ** (BITS - 1) - 1
EPS = 1e-5

# Tiling budgets (bytes).
_FAST_SLAB_BYTES = 6 * 1024 * 1024      # x slab per channel tile (resident path)
_STREAM_BLOCK_BYTES = 2 * 1024 * 1024   # per-grid-step block target (streaming)


def _quantize(x):
    """dfxp_quantize_forward: clamp(round(x/step), qmin, qmax) * step."""
    if BITS == 32:
        return x
    return jnp.clip(jnp.round(x * INV_STEP), QMIN, QMAX) * STEP


def _quantize_codes(x):
    """Integer DFXP codes: clamp(round(x/step), qmin, qmax).

    The kernels below assume BITS < 32 (for BITS == 32 every quantizer in the
    module is an identity and a plain batch-norm kernel would apply)."""
    return jnp.clip(jnp.round(x * INV_STEP), QMIN, QMAX)


# -----------------------------------------------------------------------------
# Kernels
# -----------------------------------------------------------------------------
def _bn2d_q_fast_kernel(x_ref, w_ref, b_ref, o_ref, mean_ref, var_ref,
                        *, inv_count):
    """VMEM-resident path: one grid step per channel tile, x read from HBM once."""
    x = x_ref[...].astype(jnp.float32)                  # (N, CT, M)
    q = _quantize_codes(x)                              # input ForwardQuantizer (code domain)

    # Per-channel batch statistics in the code domain (single data pass).
    s = jnp.sum(jnp.sum(q, axis=0), axis=1, keepdims=True)         # (CT, 1)
    ss = jnp.sum(jnp.sum(q * q, axis=0), axis=1, keepdims=True)    # (CT, 1)
    mean_q = s * inv_count
    # E[q^2] - mean_q^2, clamped at 0: adequate for typical BN extents; a
    # Welford/two-pass variant would be needed only for extreme N*H*W.
    var_q = jnp.maximum(ss * inv_count - mean_q * mean_q, 0.0)     # biased var (codes)
    mean = STEP * mean_q
    var = (STEP * STEP) * var_q
    r = jax.lax.rsqrt(var + EPS)

    # Rescale2d_q constants (quantized weight/bias), step folded into weight.
    wq = _quantize(w_ref[...].astype(jnp.float32))      # (CT, 1)
    bq = _quantize(b_ref[...].astype(jnp.float32))      # (CT, 1)
    w_fold = STEP * wq

    # quantize((xq - mean) * r) * wq + bq
    #   == clamp(round((q - mean_q) * r), qmin, qmax) * (step * wq) + bq
    t = jnp.clip(jnp.round((q - mean_q) * r), QMIN, QMAX)
    o_ref[...] = (t * w_fold + bq).astype(o_ref.dtype)

    mean_ref[...] = mean
    var_ref[...] = var


def _bn2d_q_stream_kernel(x_ref, w_ref, b_ref,           # inputs
                          o_ref, mean_ref, var_ref,      # outputs
                          m_sc, r_sc, wq_sc, bq_sc,      # (CT, 1) f32 scratch
                          *, inv_count):
    """Streaming two-pass path (pass 0 = stats, pass 1 = normalize)."""
    p = pl.program_id(1)
    n = pl.program_id(2)
    m = pl.program_id(3)
    first_tile = jnp.logical_and(n == 0, m == 0)

    # Input ForwardQuantizer (code domain) — needed in both passes.
    x = x_ref[...].astype(jnp.float32)                  # (NB, CT, TM)
    q = _quantize_codes(x)

    @pl.when(jnp.logical_and(p == 0, first_tile))
    def _init():
        m_sc[...] = jnp.zeros_like(m_sc)
        r_sc[...] = jnp.zeros_like(r_sc)

    @pl.when(p == 0)
    def _stats():
        # Accumulate per-channel sum / sum-of-squares of the integer codes.
        m_sc[...] += jnp.sum(jnp.sum(q, axis=0), axis=1, keepdims=True)
        r_sc[...] += jnp.sum(jnp.sum(q * q, axis=0), axis=1, keepdims=True)

    @pl.when(jnp.logical_and(p == 1, first_tile))
    def _finalize():
        # Hoisted per-channel constants, computed once per channel tile.
        mean_q = m_sc[...] * inv_count
        var_q = jnp.maximum(r_sc[...] * inv_count - mean_q * mean_q, 0.0)
        var = (STEP * STEP) * var_q
        r = jax.lax.rsqrt(var + EPS)
        m_sc[...] = mean_q                               # code-domain mean
        r_sc[...] = r
        wq_sc[...] = STEP * _quantize(w_ref[...].astype(jnp.float32))
        bq_sc[...] = _quantize(b_ref[...].astype(jnp.float32))
        mean_ref[...] = STEP * mean_q
        var_ref[...] = var

    @pl.when(p == 1)
    def _normalize():
        t = jnp.clip(jnp.round((q - m_sc[...]) * r_sc[...]), QMIN, QMAX)
        o_ref[...] = (t * wq_sc[...] + bq_sc[...]).astype(o_ref.dtype)


# -----------------------------------------------------------------------------
# Tile selection helpers
# -----------------------------------------------------------------------------
def _channel_tile_candidates(c):
    """Channel-tile sizes to try (largest first).

    Tiles must be a multiple of 8 (vreg sublanes / (8,128) BlockSpec rule) or
    equal to the full channel count.  When C allows it, tiles are capped at
    C/2 so the 'parallel' channel grid axis has >= 2 entries (keeps both v7x
    TensorCores busy)."""
    if c % 8 != 0 or c < 16:
        return [c]
    cands = [ct for ct in range(8, c // 2 + 1, 8) if c % ct == 0]
    cands.sort(reverse=True)
    return cands if cands else [c]


def _pick_tm(m):
    """Largest multiple of 128 (<= 8192) that divides M; else full M."""
    if m % 128 != 0:
        # Lane-sparse fallback (e.g. 7x7 late-conv maps).  Correct but with
        # partially masked stores; such layers almost always have a small
        # enough slab to take the VMEM-resident fast path instead.
        return m
    best = 128
    for t in range(256, min(m, 8192) + 1, 128):
        if m % t == 0:
            best = t
    return best


def _pick_nb(n, ct, tm, target_bytes):
    """Largest divisor of N keeping the (NB, CT, TM) f32 block under target."""
    best = 1
    for nb in range(1, n + 1):
        if n % nb == 0 and nb * ct * tm * 4 <= target_bytes:
            best = nb
    return best


def _vmem_limit_bytes(block_bytes):
    # in + out double-buffered (~4x block) plus elementwise temporaries (~2x)
    # plus headroom; floored at 32 MiB (above v5e's 16 MiB default scoped
    # limit) and capped at 48 MiB so the same choice stays inside v7x's
    # 64 MiB-per-TensorCore physical VMEM.
    need = 6 * block_bytes + (2 << 20)
    return int(min(max(need, 32 << 20), 48 << 20))


# -----------------------------------------------------------------------------
# Wrapper
# -----------------------------------------------------------------------------
def batchnorm2d_q(x_nchw, weight, bias, *, force_streaming=False):
    """BatchNorm2d_q forward (training mode).

    x_nchw: (N, C, H, W) float32. weight/bias: (C, 1, 1) Rescale2d_q params.
    Returns (out, batch_mean, batch_var) where batch_var is the biased batch
    variance used for normalization.  The running_mean / running_var momentum
    update (with the unbiased n/(n-1) correction) is left to the caller using
    the returned batch stats, mirroring F.batch_norm's buffer side effect.
    """
    N, C, H, W = x_nchw.shape
    M = H * W
    x = x_nchw.reshape(N, C, M)            # free reshape, no transpose
    w = weight.reshape(C, 1).astype(jnp.float32)
    b = bias.reshape(C, 1).astype(jnp.float32)
    inv_count = 1.0 / float(N * M)

    out_shape = (
        jax.ShapeDtypeStruct((N, C, M), x_nchw.dtype),
        jax.ShapeDtypeStruct((C, 1), jnp.float32),
        jax.ShapeDtypeStruct((C, 1), jnp.float32),
    )
    cands = _channel_tile_candidates(C)

    # ---------------- FAST path: whole channel-tile slab resident in VMEM ----
    fast_ct = None
    if not force_streaming:
        for ct in cands:                               # largest first
            if N * ct * M * 4 <= _FAST_SLAB_BYTES:
                fast_ct = ct
                break
    if fast_ct is not None:
        CT = fast_ct
        block_bytes = N * CT * M * 4
        out, mean, var = pl.pallas_call(
            functools.partial(_bn2d_q_fast_kernel, inv_count=inv_count),
            out_shape=out_shape,
            grid_spec=pltpu.PrefetchScalarGridSpec(
                num_scalar_prefetch=0,
                grid=(C // CT,),
                in_specs=[
                    pl.BlockSpec((N, CT, M), lambda c: (0, c, 0)),
                    pl.BlockSpec((CT, 1), lambda c: (c, 0)),
                    pl.BlockSpec((CT, 1), lambda c: (c, 0)),
                ],
                out_specs=(
                    pl.BlockSpec((N, CT, M), lambda c: (0, c, 0)),
                    pl.BlockSpec((CT, 1), lambda c: (c, 0)),
                    pl.BlockSpec((CT, 1), lambda c: (c, 0)),
                ),
            ),
            compiler_params=pltpu.CompilerParams(
                # Channel tiles are fully independent -> shard across
                # TensorCores (v7x megacore).
                dimension_semantics=("parallel",),
                vmem_limit_bytes=_vmem_limit_bytes(block_bytes),
            ),
        )(x, w, b)
        return out.reshape(N, C, H, W), mean.reshape(C), var.reshape(C)

    # ---------------- STREAMING path: two passes over HBM --------------------
    TM = _pick_tm(M)
    CT = cands[-1]                                     # smallest as fallback
    for ct in cands:                                   # largest first
        if ct * TM * 4 <= _STREAM_BLOCK_BYTES:
            CT = ct
            break
    NB = _pick_nb(N, CT, TM, _STREAM_BLOCK_BYTES)
    block_bytes = NB * CT * TM * 4

    out, mean, var = pl.pallas_call(
        functools.partial(_bn2d_q_stream_kernel, inv_count=inv_count),
        out_shape=out_shape,
        grid_spec=pltpu.PrefetchScalarGridSpec(
            num_scalar_prefetch=0,
            grid=(C // CT, 2, N // NB, M // TM),       # (ch tiles, pass, batch, M tiles)
            in_specs=[
                pl.BlockSpec((NB, CT, TM), lambda c, p, n, m: (n, c, m)),
                pl.BlockSpec((CT, 1), lambda c, p, n, m: (c, 0)),
                pl.BlockSpec((CT, 1), lambda c, p, n, m: (c, 0)),
            ],
            out_specs=(
                # Pass 0 (stats) pins the output block index at (0, c, 0) so
                # the untouched output buffer is never written back to HBM;
                # the FIRST pass-1 step (n=0, m=0) targets that same block and
                # overwrites it before any writeback occurs.  This invariant
                # relies on the grid iteration order c -> p -> n -> m.
                pl.BlockSpec((NB, CT, TM), lambda c, p, n, m: (n * p, c, m * p)),
                pl.BlockSpec((CT, 1), lambda c, p, n, m: (c, 0)),
                pl.BlockSpec((CT, 1), lambda c, p, n, m: (c, 0)),
            ),
            scratch_shapes=[pltpu.VMEM((CT, 1), jnp.float32)] * 4,
        ),
        compiler_params=pltpu.CompilerParams(
            dimension_semantics=("parallel", "arbitrary", "arbitrary", "arbitrary"),
            vmem_limit_bytes=_vmem_limit_bytes(block_bytes),
        ),
    )(x, w, b)
    return out.reshape(N, C, H, W), mean.reshape(C), var.reshape(C)


# -----------------------------------------------------------------------------
# Pure-JAX reference of the quantized BatchNorm2d forward (training mode)
# -----------------------------------------------------------------------------
def _reference(x_nchw, weight, bias):
    xq = _quantize(x_nchw)
    mean = jnp.mean(xq, axis=(0, 2, 3), keepdims=True)
    var = jnp.mean((xq - mean) ** 2, axis=(0, 2, 3), keepdims=True)
    norm = (xq - mean) * jax.lax.rsqrt(var + EPS)
    out = (_quantize(norm) * _quantize(weight.reshape(1, -1, 1, 1))
           + _quantize(bias.reshape(1, -1, 1, 1)))
    return out, mean.reshape(-1), var.reshape(-1)


if __name__ == "__main__":
    N, C, H, W = 2, 4, 16, 16
    key = jax.random.PRNGKey(0)
    x = jax.random.normal(key, (N, C, H, W), dtype=jnp.float32)

    # Module defaults after reset_parameters(): weight = ones, bias = zeros.
    w_default = jnp.ones((C, 1, 1), dtype=jnp.float32)
    b_default = jnp.zeros((C, 1, 1), dtype=jnp.float32)
    # Non-trivial affine values to exercise the folded Rescale2d_q math.
    w_affine = jnp.linspace(0.5, 1.5, C, dtype=jnp.float32).reshape(C, 1, 1)
    b_affine = jnp.linspace(-0.25, 0.25, C, dtype=jnp.float32).reshape(C, 1, 1)

    for weight, bias in ((w_default, b_default), (w_affine, b_affine)):
        ref_out, ref_mean, ref_var = _reference(x, weight, bias)
        w_max = float(jnp.max(jnp.abs(_quantize(weight))))
        # Output is quantized: allow one quantization bin (scaled by the
        # largest quantized weight) for values on a rounding tie.
        out_tol = STEP * max(1.0, w_max) + 1e-6

        for force_streaming in (False, True):      # exercise both code paths
            out, bm, bv = batchnorm2d_q(x, weight, bias,
                                        force_streaming=force_streaming)
            jax.block_until_ready((out, bm, bv))
            assert out.shape == (N, C, H, W)
            assert jnp.allclose(bm, ref_mean, atol=1e-4), "mean mismatch"
            assert jnp.allclose(bv, ref_var, atol=1e-4), "var mismatch"
            assert float(jnp.max(jnp.abs(out - ref_out))) <= out_tol, "output mismatch"

    # Running-stat momentum update from the exposed batch stats (caller-side,
    # mirroring F.batch_norm's buffer side effect in training mode).
    out, bm, bv = batchnorm2d_q(x, w_default, b_default)
    momentum, count = 0.1, N * H * W
    running_mean = (1 - momentum) * jnp.zeros(C) + momentum * bm
    running_var = (1 - momentum) * jnp.ones(C) + momentum * bv * count / (count - 1)
    jax.block_until_ready((running_mean, running_var))

    print("KERNEL_OK")
</pallas_src>

<mosaic_0001>
module attributes {stable_mosaic.version = 11 : i64} {
  func.func @_bn2d_q_fast_kernel(%arg0: i32, %arg1: memref<2x4x256xf32, #tpu.memory_space<vmem>>, %arg2: memref<4x1xf32, #tpu.memory_space<vmem>>, %arg3: memref<4x1xf32, #tpu.memory_space<vmem>>, %arg4: memref<2x4x256xf32, #tpu.memory_space<vmem>>, %arg5: memref<4x1xf32, #tpu.memory_space<vmem>>, %arg6: memref<4x1xf32, #tpu.memory_space<vmem>>) attributes {dimension_semantics = [#tpu.dimension_semantics<parallel>], iteration_bounds = array<i64: 1>, scalar_prefetch = 0 : i64, scratch_operands = 0 : i64, tpu.core_type = #tpu.core_type<tc>, window_params = [{transform_indices = @transform_0, window_bounds = array<i64: 2, 4, 256>}, {transform_indices = @transform_1, window_bounds = array<i64: 4, 1>}, {transform_indices = @transform_2, window_bounds = array<i64: 4, 1>}, {transform_indices = @transform_3, window_bounds = array<i64: 2, 4, 256>}, {transform_indices = @transform_4, window_bounds = array<i64: 4, 1>}, {transform_indices = @transform_5, window_bounds = array<i64: 4, 1>}]} {
    %c0 = arith.constant 0 : index
    %c0_0 = arith.constant 0 : index
    %c0_1 = arith.constant 0 : index
    %0 = vector.load %arg1[%c0, %c0_0, %c0_1] : memref<2x4x256xf32, #tpu.memory_space<vmem>>, vector<2x4x256xf32>
    %cst = arith.constant 3.200000e+01 : f32
    %1 = vector.broadcast %cst : f32 to vector<2x4x256xf32>
    %2 = arith.mulf %0, %1 : vector<2x4x256xf32>
    %3 = math.roundeven %2 : vector<2x4x256xf32>
    %cst_2 = arith.constant -1.280000e+02 : f32
    %cst_3 = arith.constant 1.270000e+02 : f32
    %4 = vector.broadcast %cst_2 : f32 to vector<2x4x256xf32>
    %5 = arith.maximumf %4, %3 : vector<2x4x256xf32>
    %6 = vector.broadcast %cst_3 : f32 to vector<2x4x256xf32>
    %7 = arith.minimumf %6, %5 : vector<2x4x256xf32>
    %cst_4 = arith.constant dense<0.000000e+00> : vector<4x256xf32>
    %8 = vector.multi_reduction <add>, %7, %cst_4 [0] : vector<2x4x256xf32> to vector<4x256xf32>
    %cst_5 = arith.constant dense<0.000000e+00> : vector<4xf32>
    %9 = vector.multi_reduction <add>, %8, %cst_5 [1] : vector<4x256xf32> to vector<4xf32>
    %10 = vector.shape_cast %9 : vector<4xf32> to vector<4x1xf32>
    %11 = arith.mulf %7, %7 : vector<2x4x256xf32>
    %cst_6 = arith.constant dense<0.000000e+00> : vector<4x256xf32>
    %12 = vector.multi_reduction <add>, %11, %cst_6 [0] : vector<2x4x256xf32> to vector<4x256xf32>
    %cst_7 = arith.constant dense<0.000000e+00> : vector<4xf32>
    %13 = vector.multi_reduction <add>, %12, %cst_7 [1] : vector<4x256xf32> to vector<4xf32>
    %14 = vector.shape_cast %13 : vector<4xf32> to vector<4x1xf32>
    %cst_8 = arith.constant 0.001953125 : f32
    %15 = vector.broadcast %cst_8 : f32 to vector<4x1xf32>
    %16 = arith.mulf %10, %15 : vector<4x1xf32>
    %cst_9 = arith.constant 0.001953125 : f32
    %17 = vector.broadcast %cst_9 : f32 to vector<4x1xf32>
    %18 = arith.mulf %14, %17 : vector<4x1xf32>
    %19 = arith.mulf %16, %16 : vector<4x1xf32>
    %20 = arith.subf %18, %19 : vector<4x1xf32>
    %cst_10 = arith.constant 0.000000e+00 : f32
    %21 = vector.broadcast %cst_10 : f32 to vector<4x1xf32>
    %22 = arith.maximumf %20, %21 : vector<4x1xf32>
    %cst_11 = arith.constant 3.125000e-02 : f32
    %23 = vector.broadcast %cst_11 : f32 to vector<4x1xf32>
    %24 = arith.mulf %23, %16 : vector<4x1xf32>
    %cst_12 = arith.constant 9.765625E-4 : f32
    %25 = vector.broadcast %cst_12 : f32 to vector<4x1xf32>
    %26 = arith.mulf %25, %22 : vector<4x1xf32>
    %cst_13 = arith.constant 9.99999974E-6 : f32
    %27 = vector.broadcast %cst_13 : f32 to vector<4x1xf32>
    %28 = arith.addf %26, %27 : vector<4x1xf32>
    %29 = math.rsqrt %28 : vector<4x1xf32>
    %c0_14 = arith.constant 0 : index
    %c0_15 = arith.constant 0 : index
    %30 = vector.load %arg2[%c0_14, %c0_15] : memref<4x1xf32, #tpu.memory_space<vmem>>, vector<4x1xf32>
    %cst_16 = arith.constant 3.200000e+01 : f32
    %31 = vector.broadcast %cst_16 : f32 to vector<4x1xf32>
    %32 = arith.mulf %30, %31 : vector<4x1xf32>
    %33 = math.roundeven %32 : vector<4x1xf32>
    %cst_17 = arith.constant -1.280000e+02 : f32
    %cst_18 = arith.constant 1.270000e+02 : f32
    %34 = vector.broadcast %cst_17 : f32 to vector<4x1xf32>
    %35 = arith.maximumf %34, %33 : vector<4x1xf32>
    %36 = vector.broadcast %cst_18 : f32 to vector<4x1xf32>
    %37 = arith.minimumf %36, %35 : vector<4x1xf32>
    %cst_19 = arith.constant 3.125000e-02 : f32
    %38 = vector.broadcast %cst_19 : f32 to vector<4x1xf32>
    %39 = arith.mulf %37, %38 : vector<4x1xf32>
    %c0_20 = arith.constant 0 : index
    %c0_21 = arith.constant 0 : index
    %40 = vector.load %arg3[%c0_20, %c0_21] : memref<4x1xf32, #tpu.memory_space<vmem>>, vector<4x1xf32>
    %cst_22 = arith.constant 3.200000e+01 : f32
    %41 = vector.broadcast %cst_22 : f32 to vector<4x1xf32>
    %42 = arith.mulf %40, %41 : vector<4x1xf32>
    %43 = math.roundeven %42 : vector<4x1xf32>
    %cst_23 = arith.constant -1.280000e+02 : f32
    %cst_24 = arith.constant 1.270000e+02 : f32
    %44 = vector.broadcast %cst_23 : f32 to vector<4x1xf32>
    %45 = arith.maximumf %44, %43 : vector<4x1xf32>
    %46 = vector.broadcast %cst_24 : f32 to vector<4x1xf32>
    %47 = arith.minimumf %46, %45 : vector<4x1xf32>
    %cst_25 = arith.constant 3.125000e-02 : f32
    %48 = vector.broadcast %cst_25 : f32 to vector<4x1xf32>
    %49 = arith.mulf %47, %48 : vector<4x1xf32>
    %cst_26 = arith.constant 3.125000e-02 : f32
    %50 = vector.broadcast %cst_26 : f32 to vector<4x1xf32>
    %51 = arith.mulf %50, %39 : vector<4x1xf32>
    %52 = vector.shape_cast %16 : vector<4x1xf32> to vector<1x4x1xf32>
    %53 = vector.broadcast %52 : vector<1x4x1xf32> to vector<2x4x256xf32>
    %54 = arith.subf %7, %53 : vector<2x4x256xf32>
    %55 = vector.shape_cast %29 : vector<4x1xf32> to vector<1x4x1xf32>
    %56 = vector.broadcast %55 : vector<1x4x1xf32> to vector<2x4x256xf32>
    %57 = arith.mulf %54, %56 : vector<2x4x256xf32>
    %58 = math.roundeven %57 : vector<2x4x256xf32>
    %cst_27 = arith.constant -1.280000e+02 : f32
    %cst_28 = arith.constant 1.270000e+02 : f32
    %59 = vector.broadcast %cst_27 : f32 to vector<2x4x256xf32>
    %60 = arith.maximumf %59, %58 : vector<2x4x256xf32>
    %61 = vector.broadcast %cst_28 : f32 to vector<2x4x256xf32>
    %62 = arith.minimumf %61, %60 : vector<2x4x256xf32>
    %63 = vector.shape_cast %51 : vector<4x1xf32> to vector<1x4x1xf32>
    %64 = vector.broadcast %63 : vector<1x4x1xf32> to vector<2x4x256xf32>
    %65 = arith.mulf %62, %64 : vector<2x4x256xf32>
    %66 = vector.shape_cast %49 : vector<4x1xf32> to vector<1x4x1xf32>
    %67 = vector.broadcast %66 : vector<1x4x1xf32> to vector<2x4x256xf32>
    %68 = arith.addf %65, %67 : vector<2x4x256xf32>
    %c0_29 = arith.constant 0 : index
    %c0_30 = arith.constant 0 : index
    %c0_31 = arith.constant 0 : index
    %69 = vector.load %arg4[%c0_29, %c0_30, %c0_31] : memref<2x4x256xf32, #tpu.memory_space<vmem>>, vector<2x4x256xf32>
    tpu.vector_store %arg4[%c0_29, %c0_30, %c0_31], %68 {strides = array<i32>} : memref<2x4x256xf32, #tpu.memory_space<vmem>>, vector<2x4x256xf32>,
    %c0_32 = arith.constant 0 : index
    %c0_33 = arith.constant 0 : index
    %70 = vector.load %arg5[%c0_32, %c0_33] : memref<4x1xf32, #tpu.memory_space<vmem>>, vector<4x1xf32>
    tpu.vector_store %arg5[%c0_32, %c0_33], %24 {strides = array<i32>} : memref<4x1xf32, #tpu.memory_space<vmem>>, vector<4x1xf32>,
    %c0_34 = arith.constant 0 : index
    %c0_35 = arith.constant 0 : index
    %71 = vector.load %arg6[%c0_34, %c0_35] : memref<4x1xf32, #tpu.memory_space<vmem>>, vector<4x1xf32>
    tpu.vector_store %arg6[%c0_34, %c0_35], %26 {strides = array<i32>} : memref<4x1xf32, #tpu.memory_space<vmem>>, vector<4x1xf32>,
    return
  }
  func.func @transform_0(%arg0: i32) -> (i32, i32, i32) {
    %c0_i32 = arith.constant 0 : i32
    %c0_i32_0 = arith.constant 0 : i32
    %c0_i32_1 = arith.constant 0 : i32
    return %c0_i32, %arg0, %c0_i32_0 : i32, i32, i32
  }
  func.func @transform_1(%arg0: i32) -> (i32, i32) {
    %c0_i32 = arith.constant 0 : i32
    %c0_i32_0 = arith.constant 0 : i32
    return %arg0, %c0_i32 : i32, i32
  }
  func.func @transform_2(%arg0: i32) -> (i32, i32) {
    %c0_i32 = arith.constant 0 : i32
    %c0_i32_0 = arith.constant 0 : i32
    return %arg0, %c0_i32 : i32, i32
  }
  func.func @transform_3(%arg0: i32) -> (i32, i32, i32) {
    %c0_i32 = arith.constant 0 : i32
    %c0_i32_0 = arith.constant 0 : i32
    %c0_i32_1 = arith.constant 0 : i32
    return %c0_i32, %arg0, %c0_i32_0 : i32, i32, i32
  }
  func.func @transform_4(%arg0: i32) -> (i32, i32) {
    %c0_i32 = arith.constant 0 : i32
    %c0_i32_0 = arith.constant 0 : i32
    return %arg0, %c0_i32 : i32, i32
  }
  func.func @transform_5(%arg0: i32) -> (i32, i32) {
    %c0_i32 = arith.constant 0 : i32
    %c0_i32_0 = arith.constant 0 : i32
    return %arg0, %c0_i32 : i32, i32
  }
}

</mosaic_0001>

<llo_original>
// kernel: tpu_custom_call.1
$region0: #{tpu_custom_call.1}
  #allocation0 [shape = 'u32[]', space=smem, size = 0x4, offset = 0x4, fixed_abs, tag = 'smem constant byte address 0x4 - core index']
  #allocation1 [shape = 'u32[144,128]{1,0:T(1,128)}', space=vmem, size = 0x12000, scoped, tag = 'internal scratch']
  %s0 = inlined_call_operand.hbm [shape: f32[2,4,256], index: 0, kind: input, shape index: {}]
  %s1 = inlined_call_operand.vmem [shape: f32[4,1], index: 1, kind: input, shape index: {}]
  %s2 = inlined_call_operand.vmem [shape: f32[4,1], index: 2, kind: input, shape index: {}]
  %s3 = inlined_call_operand.hbm [shape: f32[2,4,256], index: 3, kind: output, shape index: {0}]
  %s4 = inlined_call_operand.vmem [shape: f32[4,1], index: 4, kind: output, shape index: {1}]
  %s5 = inlined_call_operand.vmem [shape: f32[4,1], index: 5, kind: output, shape index: {2}]
  %6 = xla_tuple %s3, %s4, %s5
  %s7 = sld [smem:[#allocation0]]
  $region42: #{tpu_custom_call.1} parent=0
    _
  %s9 = ssub.s32 1, %s7
  %s10 = scalar_select 0, %s9, %s7
  $region1: #{tpu_custom_call.1} parent=0
    #allocation2 [shape = 'u8[8192]{0}', space=vmem, size = 0x2000, scoped, tag = 'input window, operand 0, single buffered']
    #allocation3 [shape = 's32[1]{0}', space=sflag, size = 0x4, scoped, tag = 'scoped memory for tpu_custom_call.1']
    #allocation4 [shape = 's32[1]{0}', space=sflag, size = 0x4, scoped, tag = 'scoped memory for tpu_custom_call.1']
    #allocation5 [shape = 'u8[8192]{0}', space=vmem, size = 0x2000, scoped, tag = 'output window, operand 0, single buffered']
    %11 = vsyncpa [#allocation3], 0
    %12 = vsyncpa [#allocation4], 0
    // Predicated region
    $region2: #{tpu_custom_call.1} parent=1 // pred_check
      _
    $region3: #{tpu_custom_call.1} parent=1 // pred_check_branch
      %14 = sbr.rel (0) target = $region5
    $region4: #{tpu_custom_call.1} parent=1 // pred_region
      %s16 = ssub.s32 256, 256
      %17 = vsyncadd [#allocation3], %s16
      %s18 = sshll.u32 [#allocation2], 4
      %s19 = int_to_ptr.vmem [resolvable:$true] %s18
      %24 = dma.hbm_to_vmem [thread:$0]  %s0, 256, %s19, [#allocation3], 128, 128, 8
    $region5: #{tpu_custom_call.1} parent=1 // pred_fallthru
      _
    // Predicated region
    $region6: #{tpu_custom_call.1} parent=1 // pred_check
      _
    $region7: #{tpu_custom_call.1} parent=1 // pred_check_branch
      %26 = sbr.rel (0) target = $region9
    $region8: #{tpu_custom_call.1} parent=1 // pred_region
      _
    $region9: #{tpu_custom_call.1} parent=1 // pred_fallthru
      _
    // Predicated region
    $region10: #{tpu_custom_call.1} parent=1 // pred_check
      _
    $region11: #{tpu_custom_call.1} parent=1 // pred_check_branch
      %28 = sbr.rel (0) target = $region13
    $region12: #{tpu_custom_call.1} parent=1 // pred_region
      _
    $region13: #{tpu_custom_call.1} parent=1 // pred_fallthru
      _
    // Predicated region
    $region14: #{tpu_custom_call.1} parent=1 // pred_check
      _
    $region15: #{tpu_custom_call.1} parent=1 // pred_check_branch
      %30 = sbr.rel (0) target = $region17
    $region16: #{tpu_custom_call.1} parent=1 // pred_region
      %31 = dma.done [#allocation3], 256
    $region17: #{tpu_custom_call.1} parent=1 // pred_fallthru
      _
    %v32 = vld [vmem:[#allocation2] sm:$0xff]
    %v33 = vld [vmem:[#allocation2 + $0x8] sm:$0xff]
    %v34 = vmul.f32 %v32, 32.0
    %v35 = vmul.f32 %v33, 32.0
    %v36 = vround.ne.pseudo %v34
    %v37 = vround.ne.pseudo %v35
    %v38 = vmax.f32 %v36, -128.0
    %v39 = vmax.f32 %v37, -128.0
    %v40 = vmin.f32 %v38, 127.0
    %v41 = vmin.f32 %v39, 127.0
    %v44 = vcombine.high %v40, %v40
    %v45 = vcombine.high %v41, %v41
    %vm48 = vcmask 1043456
    %v49 = vsel %vm48, %v40, 0.0
    %v50 = vsel %vm48, %v41, 0.0
    %v51 = vadd.f32 %v49, %v50
    %v52 = vsel %vm48, %v44, 0.0
    %v53 = vsel %vm48, %v45, 0.0
    %v54 = vadd.f32 %v52, %v53
    %v55 = vsel %vm48, %v51, 0.0
    %v56 = vsel %vm48, %v54, 0.0
    %v57 = vadd.f32 %v55, %v56
    %58 = vadd.xlane.f32.xlu0 %v57
    %v59 = vpop.xlane.xlu0 %58
    %v60 = vmul.f32 %v40, %v40
    %v61 = vmul.f32 %v41, %v41
    %v64 = vcombine.high %v60, %v60
    %v65 = vcombine.high %v61, %v61
    %v68 = vsel %vm48, %v60, 0.0
    %v69 = vsel %vm48, %v61, 0.0
    %v70 = vadd.f32 %v68, %v69
    %v71 = vsel %vm48, %v64, 0.0
    %v72 = vsel %vm48, %v65, 0.0
    %v73 = vadd.f32 %v71, %v72
    %v74 = vsel %vm48, %v70, 0.0
    %v75 = vsel %vm48, %v73, 0.0
    %v76 = vadd.f32 %v74, %v75
    %77 = vadd.xlane.f32.xlu0 %v76
    %v78 = vpop.xlane.xlu0 %77
    %v79 = vmul.f32 %v59, 0.001953125
    %v80 = vmul.f32 %v78, 0.001953125
    %v81 = vmul.f32 %v79, %v79
    %v82 = vsub.f32 %v80, %v81
    %v83 = vmax.f32 %v82, 0.0
    %v84 = vmul.f32 %v79, 0.03125
    %v85 = vmul.f32 %v83, 0.0009765625
    %v86 = vadd.f32 %v85, 1e-05
    %v87 = vrsqrt.pop %v86
    %v88 = vld [vmem:[%s1] sm:$0xf]
    %v89 = vmul.f32 %v88, 32.0
    %v90 = vround.ne.pseudo %v89
    %v91 = vmax.f32 %v90, -128.0
    %v92 = vmin.f32 %v91, 127.0
    %v93 = vmul.f32 %v92, 0.03125
    %v94 = vld [vmem:[%s2] sm:$0xf]
    %v95 = vmul.f32 %v94, 32.0
    %v96 = vround.ne.pseudo %v95
    %v97 = vmax.f32 %v96, -128.0
    %v98 = vmin.f32 %v97, 127.0
    %v99 = vmul.f32 %v98, 0.03125
    %v100 = vmul.f32 %v93, 0.03125
    %v103 = vunpack.c.l.s4 839922192
    %v104 = vunpack.c.0.s8 %v103
    %v105 = vlaneseq
    %v106 = vshrl.u32 %v105, 7
    %v107 = vsub.s32 %v104, %v106
    %v108 = vrot.slane %v79, %v107
    %v110 = vsub.f32 %v40, %v108
    %v111 = vsub.f32 %v41, %v108
    %v114 = vunpack.c.l.s4 839922192
    %v115 = vunpack.c.0.s8 %v114
    %v116 = vlaneseq
    %v117 = vshrl.u32 %v116, 7
    %v118 = vsub.s32 %v115, %v117
    %v119 = vrot.slane %v87, %v118
    %v121 = vmul.f32 %v110, %v119
    %v122 = vmul.f32 %v111, %v119
    %v123 = vround.ne.pseudo %v121
    %v124 = vround.ne.pseudo %v122
    %v125 = vmax.f32 %v123, -128.0
    %v126 = vmax.f32 %v124, -128.0
    %v127 = vmin.f32 %v125, 127.0
    %v128 = vmin.f32 %v126, 127.0
    %130 = vset.pattern.permute.xlu0 0
    %131 = vperm.xlu0 %130, %v100
    %v132 = vpop.permute.xlu0 %131
    %v134 = vunpack.c.l.s4 839922192
    %v135 = vunpack.c.0.s8 %v134
    %v136 = vlaneseq
    %v137 = vshrl.u32 %v136, 7
    %v138 = vsub.s32 %v135, %v137
    %v139 = vrot.slane %v132, %v138
    %v141 = vmul.f32 %v127, %v139
    %v142 = vmul.f32 %v128, %v139
    %144 = vset.pattern.permute.xlu0 0
    %145 = vperm.xlu0 %144, %v99
    %v146 = vpop.permute.xlu0 %145
    %v148 = vunpack.c.l.s4 839922192
    %v149 = vunpack.c.0.s8 %v148
    %v150 = vlaneseq
    %v151 = vshrl.u32 %v150, 7
    %v152 = vsub.s32 %v149, %v151
    %v153 = vrot.slane %v146, %v152
    %v155 = vadd.f32 %v141, %v153
    %v156 = vadd.f32 %v142, %v153
    %157 = vst [vmem:[#allocation5] sm:$0xff] %v155
    %158 = vst [vmem:[#allocation5 + $0x8] sm:$0xff] %v156
    %vm159 = vcmask 3072
    %160 = vst.msk [vmem:[%s4] sm:$0xf] %vm159, %v84
    %161 = vst.msk [vmem:[%s5] sm:$0xf] %vm159, %v85
    // Predicated region
    $region18: #{tpu_custom_call.1} parent=1 // pred_check
      _
    $region19: #{tpu_custom_call.1} parent=1 // pred_check_branch
      %163 = sbr.rel (0) target = $region21
    $region20: #{tpu_custom_call.1} parent=1 // pred_region
      %s165 = ssub.s32 256, 256
      %166 = vsyncadd [#allocation4], %s165
      %s167 = sshll.u32 [#allocation5], 4
      %s168 = int_to_ptr.vmem [resolvable:$true] %s167
      %173 = dma.vmem_to_hbm [thread:$0]  %s168, 256, %s3, [#allocation4], 128, 128, 8
    $region21: #{tpu_custom_call.1} parent=1 // pred_fallthru
      _
    // Predicated region
    $region22: #{tpu_custom_call.1} parent=1 // pred_check
      _
    $region23: #{tpu_custom_call.1} parent=1 // pred_check_branch
      %175 = sbr.rel (0) target = $region25
    $region24: #{tpu_custom_call.1} parent=1 // pred_region
      _
    $region25: #{tpu_custom_call.1} parent=1 // pred_fallthru
      _
    // Predicated region
    $region26: #{tpu_custom_call.1} parent=1 // pred_check
      _
    $region27: #{tpu_custom_call.1} parent=1 // pred_check_branch
      %177 = sbr.rel (0) target = $region29
    $region28: #{tpu_custom_call.1} parent=1 // pred_region
      _
    $region29: #{tpu_custom_call.1} parent=1 // pred_fallthru
      _
    // Predicated region
    $region30: #{tpu_custom_call.1} parent=1 // pred_check
      _
    $region31: #{tpu_custom_call.1} parent=1 // pred_check_branch
      %179 = sbr.rel (0) target = $region33
    $region32: #{tpu_custom_call.1} parent=1 // pred_region
      %180 = dma.done [#allocation4], 256
    $region33: #{tpu_custom_call.1} parent=1 // pred_fallthru
      _
    // Predicated region
    $region34: #{tpu_custom_call.1} parent=1 // pred_check
      _
    $region35: #{tpu_custom_call.1} parent=1 // pred_check_branch
      %182 = sbr.rel (0) target = $region37
    $region36: #{tpu_custom_call.1} parent=1 // pred_region
      _
    $region37: #{tpu_custom_call.1} parent=1 // pred_fallthru
      _
    // Predicated region
    $region38: #{tpu_custom_call.1} parent=1 // pred_check
      _
    $region39: #{tpu_custom_call.1} parent=1 // pred_check_branch
      %184 = sbr.rel (0) target = $region41
    $region40: #{tpu_custom_call.1} parent=1 // pred_region
      _
    $region41: #{tpu_custom_call.1} parent=1 // pred_fallthru
      _
    %185 = vsyncpa [#allocation3], 1
    %186 = vsyncpa [#allocation4], 1

</llo_original>
